<compile_context>
chip_gen: v6e
topology: v6e:2x2x1
jax: 0.10.0
libtpu: 0.0.40
codegen_flags: <defaults>
</compile_context>

<pallas_src>
import math

import jax
import jax.numpy as jnp
from jax.experimental import pallas as pl
from jax.experimental.pallas import tpu as pltpu


# --------------------------------------------------------------------------
# Kernels
# --------------------------------------------------------------------------
def _pe_add_bcast_kernel(x_ref, pe_ref, o_ref):
    # x_ref / o_ref : (ts, B, D) VMEM tile; pe_ref : (ts, 1, D).
    # Sublane broadcast of pe over the batch axis is nearly free on the VPU.
    o_ref[...] = x_ref[...] + pe_ref[...]


def _pe_add_lane_kernel(x_ref, pe_ref, o_ref):
    # x_ref / o_ref : (ts, B*D) lane-dense VMEM tile; pe_ref : (ts, D).
    d = pe_ref.shape[1]
    b = x_ref.shape[1] // d
    pe_tile = pe_ref[...]
    reps = 1
    while reps * 2 <= b:                      # log2(B) self-doubling concats
        pe_tile = jnp.concatenate([pe_tile, pe_tile], axis=-1)
        reps *= 2
    if reps < b:                              # non-power-of-two remainder
        pe_tile = jnp.concatenate([pe_tile, pe_tile[:, : (b - reps) * d]], axis=-1)
    o_ref[...] = x_ref[...] + pe_tile


# --------------------------------------------------------------------------
# pe buffer construction (matches the PyTorch __init__)
# --------------------------------------------------------------------------
def make_positional_encoding(d_model: int, max_len: int = 5000, dtype=jnp.float32):
    assert d_model % 2 == 0, "d_model must be even (as in the reference module)"
    position = jnp.arange(max_len, dtype=jnp.float32)[:, None]            # (max_len, 1)
    div_term = jnp.exp(
        jnp.arange(0, d_model, 2, dtype=jnp.float32)
        * (-math.log(10000.0) / d_model)
    )                                                                      # (d_model/2,)
    ang = position * div_term                                              # (max_len, d/2)
    pe = jnp.stack([jnp.sin(ang), jnp.cos(ang)], axis=-1).reshape(max_len, d_model)
    return pe[:, None, :].astype(dtype)                                    # (max_len, 1, d)


# --------------------------------------------------------------------------
# Tiling helpers
# --------------------------------------------------------------------------
def _sublane_multiple(itemsize: int) -> int:
    # (8,128) native tile for 32-bit; packed dtypes need 16/32-row sublanes.
    return max(8, 32 // max(itemsize, 1))


def _default_target_block_bytes() -> int:
    # v7x (64 MiB VMEM, ~3.2 TB/s HBM) benefits most from bigger tiles; use
    # 8 MiB there and 6 MiB elsewhere.  Gracefully fall back if query fails.
    try:
        info = pltpu.get_tpu_info()
        vmem = getattr(info, "vmem_capacity_bytes", None)
        if vmem is not None and vmem <= (64 << 20):
            return 8 << 20
    except Exception:
        pass
    return 6 << 20


def _pick_seq_tile(S: int, row_bytes: int, target_bytes: int, sublane: int) -> int:
    """Largest divisor of S that is a multiple of `sublane`, keeps the x block
    around `target_bytes`, and leaves >= 4 grid steps when possible (>= 2
    otherwise) so the pipeline reaches steady state on every TensorCore."""
    cands = [d for d in range(sublane, S + 1, sublane) if S % d == 0 and d < S]
    if not cands:
        return S                               # tiny/awkward S: one full block
    budget_rows = max(sublane, target_bytes // max(row_bytes, 1))
    for min_steps in (4, 2):
        pool = [d for d in cands if S // d >= min_steps]
        if not pool:
            continue
        fitting = [d for d in pool if d <= budget_rows]
        return max(fitting) if fitting else min(pool)
    return S


# --------------------------------------------------------------------------
# Forward wrapper
# --------------------------------------------------------------------------
def positional_encoding_forward(x, pe, *, seq_tile=None, target_block_bytes=None):
    """x: (S, B, D); pe: (max_len, 1, D). Returns x + pe[:S] (broadcast over batch)."""
    S, B, D = x.shape
    max_len = pe.shape[0]
    assert S <= max_len, "sequence length exceeds positional-encoding max_len"

    if pe.dtype != x.dtype:
        pe = pe.astype(x.dtype)     # prefer building pe in x.dtype at the call site

    itemsize = jnp.dtype(x.dtype).itemsize
    sublane = _sublane_multiple(itemsize)
    if target_block_bytes is None:
        target_block_bytes = _default_target_block_bytes()

    row_bytes = B * D * itemsize
    ts = seq_tile if seq_tile is not None else _pick_seq_tile(
        S, row_bytes, target_block_bytes, sublane)
    if S % ts != 0:
        raise ValueError("seq_tile must divide the sequence length")
    if ts != S and ts % sublane != 0:
        raise ValueError(f"seq_tile must be a multiple of {sublane} for this dtype "
                         "(or equal to the sequence length)")
    grid = (S // ts,)

    # VMEM budget: x/out blocks double-buffered (even with aliasing), pe blocks
    # double-buffered, plus one x-block-sized allowance for the in-kernel pe
    # replication temp (lane path) and headroom for Mosaic scratch.
    x_block_bytes = ts * B * D * itemsize
    pe_block_bytes = ts * D * itemsize
    vmem_limit = 2 * (2 * x_block_bytes + pe_block_bytes) + x_block_bytes + (6 << 20)
    vmem_limit = int(min(max(vmem_limit, 24 << 20), 48 << 20))

    cparams = pltpu.CompilerParams(
        dimension_semantics=("parallel",),
        vmem_limit_bytes=vmem_limit,
    )

    if D % 128 == 0:
        # 3-D sublane-broadcast path: no replication temp at all.
        out = pl.pallas_call(
            _pe_add_bcast_kernel,
            out_shape=jax.ShapeDtypeStruct((S, B, D), x.dtype),
            grid_spec=pltpu.PrefetchScalarGridSpec(
                num_scalar_prefetch=0,
                grid=grid,
                in_specs=[
                    pl.BlockSpec((ts, B, D), lambda i: (i, 0, 0)),   # x rows
                    pl.BlockSpec((ts, 1, D), lambda i: (i, 0, 0)),   # pe rows 0..S-1 only
                ],
                out_specs=pl.BlockSpec((ts, B, D), lambda i: (i, 0, 0)),
            ),
            compiler_params=cparams,
            input_output_aliases={0: 0},   # in-place add on x's buffer
        )(x, pe)
        return out

    # Lane-dense 2-D path (free reshapes of the contiguous seq-first layout).
    x2 = x.reshape(S, B * D)
    pe2 = pe.reshape(max_len, D)
    if ts == S and S % sublane != 0:
        # Degenerate single-block path: block dims must equal full array dims.
        pe2 = pe2[:S]

    out2 = pl.pallas_call(
        _pe_add_lane_kernel,
        out_shape=jax.ShapeDtypeStruct((S, B * D), x.dtype),
        grid_spec=pltpu.PrefetchScalarGridSpec(
            num_scalar_prefetch=0,
            grid=grid,
            in_specs=[
                pl.BlockSpec((ts, B * D), lambda i: (i, 0)),   # x rows, lane-dense
                pl.BlockSpec((ts, D), lambda i: (i, 0)),       # pe rows 0..S-1 only
            ],
            out_specs=pl.BlockSpec((ts, B * D), lambda i: (i, 0)),
        ),
        compiler_params=cparams,
        input_output_aliases={0: 0},   # in-place add on x's buffer
    )(x2, pe2)

    return out2.reshape(S, B, D)


# --------------------------------------------------------------------------
# Self-test
# --------------------------------------------------------------------------
if __name__ == "__main__":
    key = jax.random.PRNGKey(0)
    k1, k2 = jax.random.split(key)
    max_len = 64

    # Path 1: lane-dense 2-D path (D % 128 != 0).  seq=16, batch=4, d_model=32.
    S, B, D = 16, 4, 32
    x = jax.random.normal(k1, (S, B, D), dtype=jnp.float32)
    pe = make_positional_encoding(D, max_len=max_len, dtype=x.dtype)
    ref = x + pe[:S]                                   # plain-JAX reference
    out = jax.block_until_ready(positional_encoding_forward(x, pe))
    assert out.shape == (S, B, D)
    assert jnp.allclose(out, ref, atol=1e-6, rtol=1e-6)

    # Path 2: 3-D sublane-broadcast path (D % 128 == 0).  seq=16, batch=2, d_model=128.
    S2, B2, D2 = 16, 2, 128
    x_b = jax.random.normal(k2, (S2, B2, D2), dtype=jnp.float32)
    pe_b = make_positional_encoding(D2, max_len=max_len, dtype=x_b.dtype)
    ref_b = x_b + pe_b[:S2]
    out_b = jax.block_until_ready(positional_encoding_forward(x_b, pe_b))
    assert out_b.shape == (S2, B2, D2)
    assert jnp.allclose(out_b, ref_b, atol=1e-6, rtol=1e-6)

    print("KERNEL_OK")
</pallas_src>

<mosaic_0001>
module attributes {stable_mosaic.version = 11 : i64} {
  func.func @_pe_add_lane_kernel(%arg0: i32, %arg1: memref<8x128xf32, #tpu.memory_space<vmem>>, %arg2: memref<8x32xf32, #tpu.memory_space<vmem>>, %arg3: memref<8x128xf32, #tpu.memory_space<vmem>>) attributes {dimension_semantics = [#tpu.dimension_semantics<parallel>], iteration_bounds = array<i64: 2>, scalar_prefetch = 0 : i64, scratch_operands = 0 : i64, tpu.core_type = #tpu.core_type<tc>, window_params = [{transform_indices = @transform_0, window_bounds = array<i64: 8, 128>}, {transform_indices = @transform_1, window_bounds = array<i64: 8, 32>}, {transform_indices = @transform_2, window_bounds = array<i64: 8, 128>}]} {
    %c0 = arith.constant 0 : index
    %c0_0 = arith.constant 0 : index
    %0 = vector.load %arg2[%c0, %c0_0] : memref<8x32xf32, #tpu.memory_space<vmem>>, vector<8x32xf32>
    %1 = tpu.concatenate %0, %0 in 1 : vector<8x32xf32>, vector<8x32xf32> -> vector<8x64xf32>
    %2 = tpu.concatenate %1, %1 in 1 : vector<8x64xf32>, vector<8x64xf32> -> vector<8x128xf32>
    %c0_1 = arith.constant 0 : index
    %c0_2 = arith.constant 0 : index
    %3 = vector.load %arg1[%c0_1, %c0_2] : memref<8x128xf32, #tpu.memory_space<vmem>>, vector<8x128xf32>
    %4 = arith.addf %3, %2 : vector<8x128xf32>
    %c0_3 = arith.constant 0 : index
    %c0_4 = arith.constant 0 : index
    %5 = vector.load %arg3[%c0_3, %c0_4] : memref<8x128xf32, #tpu.memory_space<vmem>>, vector<8x128xf32>
    tpu.vector_store %arg3[%c0_3, %c0_4], %4 {strides = array<i32>} : memref<8x128xf32, #tpu.memory_space<vmem>>, vector<8x128xf32>,
    return
  }
  func.func @transform_0(%arg0: i32) -> (i32, i32) {
    %c0_i32 = arith.constant 0 : i32
    %c0_i32_0 = arith.constant 0 : i32
    return %arg0, %c0_i32 : i32, i32
  }
  func.func @transform_1(%arg0: i32) -> (i32, i32) {
    %c0_i32 = arith.constant 0 : i32
    %c0_i32_0 = arith.constant 0 : i32
    return %arg0, %c0_i32 : i32, i32
  }
  func.func @transform_2(%arg0: i32) -> (i32, i32) {
    %c0_i32 = arith.constant 0 : i32
    %c0_i32_0 = arith.constant 0 : i32
    return %arg0, %c0_i32 : i32, i32
  }
}

</mosaic_0001>

<llo_original>
// kernel: tpu_custom_call.1
$region0: #{tpu_custom_call.1}
  #allocation0 [shape = 'u32[]', space=smem, size = 0x4, offset = 0x4, fixed_abs, tag = 'smem constant byte address 0x4 - core index']
  #allocation1 [shape = 'u32[144,128]{1,0:T(1,128)}', space=vmem, size = 0x12000, scoped, tag = 'internal scratch']
  %s0 = inlined_call_operand.hbm [shape: f32[16,128], index: 0, kind: input, shape index: {}, may-alias: {0,2}]
  %s1 = inlined_call_operand.vmem [shape: f32[64,32], index: 1, kind: input, shape index: {}]
  %s2 = inlined_call_operand.hbm [shape: f32[16,128], index: 2, kind: output, shape index: {}, may-alias: {0,2}]
  %s3 = sld [smem:[#allocation0]]
  $region45: #{tpu_custom_call.1} parent=0
    _
  %s5 = ssub.s32 1, %s3
  %s6 = scalar_select 0, %s5, %s3
  $region1: #{tpu_custom_call.1} parent=0
    #allocation2 [shape = 'u8[8192]{0}', space=vmem, size = 0x2000, scoped, tag = 'input window, operand 0']
    #allocation3 [shape = 's32[2]{0}', space=sflag, size = 0x8, scoped, tag = 'scoped memory for tpu_custom_call.1']
    #allocation4 [shape = 's32[2]{0}', space=sflag, size = 0x8, scoped, tag = 'scoped memory for tpu_custom_call.1']
    #allocation5 [shape = 'u8[8192]{0}', space=vmem, size = 0x2000, scoped, tag = 'output window, operand 0']
    %7 = vsyncpa [#allocation3], 0
    %s8 = scalar_lea.sflag [#allocation3], 1
    %9 = vsyncpa %s8, 0
    %10 = vsyncpa [#allocation4], 0
    %s11 = scalar_lea.sflag [#allocation4], 1
    %12 = vsyncpa %s11, 0
    loop: start=0, step=1, limit=4
    $region2: #{tpu_custom_call.1} parent=1 // loop_pre_header
      _
    $region3: #{tpu_custom_call.1} parent=1 // loop_header
      %s14 = sphi 0, %s18
      %p15 = scmp.ge.s32.totalorder %s14, 4
      %s24 = sphi 0, %s26
      %s27 = sphi 0, %s24
      %s28 = sphi 0, %s27
      %s44 = sphi 0, %s28
      %s50 = sphi 0, %s52
      %s53 = sphi 0, %s50
      %s54 = sphi 0, %s53
      %s70 = sphi 0, %s54
      %s76 = sphi 0, %s78
      %s79 = sphi 0, %s76
      %s80 = sphi 0, %s79
      %s96 = sphi 0, %s80
    $region4: #{tpu_custom_call.1} parent=1 // loop_header_branch
      %17 = sbr.rel (%p15) target = $region8
    $region5: #{tpu_custom_call.1} parent=1 // loop_body
      %s19 = ssub.s32 %s14, 1
      %s20 = ssub.s32 %s14, 2
      %s21 = sadd.s32 %s14, 1
      %s22 = ssub.s32 %s14, %s21
      %p23 = scmp.eq.s32.totalorder %s22, 0
      %s25 = sadd.s32 %s24, 1
      %s26 = scalar_select %p23, %s24, %s25
      %p29 = pneg %p23
      %p30 = scmp.eq.s32.totalorder %s14, 1
      %p31 = por %p29, %p30
      %p32 = scmp.ne.s32.totalorder %s24, %s27
      %p33 = scmp.eq.s32.totalorder %s14, 0
      %p34 = por %p32, %p33
      %p35 = scmp.ne.s32.totalorder %s24, %s27
      %p36 = scmp.eq.s32.totalorder %s19, 1
      %p37 = por %p35, %p36
      %p38 = scmp.ne.s32.totalorder %s27, %s28
      %p39 = scmp.eq.s32.totalorder %s19, 0
      %p40 = por %p38, %p39
      %p41 = scmp.ne.s32.totalorder %s27, %s28
      %p42 = scmp.eq.s32.totalorder %s20, 1
      %p43 = por %p41, %p42
      %p45 = scmp.ne.s32.totalorder %s28, %s44
      %p46 = scmp.eq.s32.totalorder %s20, 0
      %p47 = por %p45, %p46
      %s48 = ssub.s32 %s14, %s21
      %p49 = scmp.eq.s32.totalorder %s48, 0
      %s51 = sadd.s32 %s50, 1
      %s52 = scalar_select %p49, %s50, %s51
      %p55 = pneg %p49
      %p56 = scmp.eq.s32.totalorder %s14, 1
      %p57 = por %p55, %p56
      %p58 = scmp.ne.s32.totalorder %s50, %s53
      %p59 = scmp.eq.s32.totalorder %s14, 0
      %p60 = por %p58, %p59
      %p61 = scmp.ne.s32.totalorder %s50, %s53
      %p62 = scmp.eq.s32.totalorder %s19, 1
      %p63 = por %p61, %p62
      %p64 = scmp.ne.s32.totalorder %s53, %s54
      %p65 = scmp.eq.s32.totalorder %s19, 0
      %p66 = por %p64, %p65
      %p67 = scmp.ne.s32.totalorder %s53, %s54
      %p68 = scmp.eq.s32.totalorder %s20, 1
      %p69 = por %p67, %p68
      %p71 = scmp.ne.s32.totalorder %s54, %s70
      %p72 = scmp.eq.s32.totalorder %s20, 0
      %p73 = por %p71, %p72
      %s74 = ssub.s32 %s14, %s21
      %p75 = scmp.eq.s32.totalorder %s74, 0
      %s77 = sadd.s32 %s76, 1
      %s78 = scalar_select %p75, %s76, %s77
      %p81 = pneg %p75
      %p82 = scmp.eq.s32.totalorder %s14, 1
      %p83 = por %p81, %p82
      %p84 = scmp.ne.s32.totalorder %s76, %s79
      %p85 = scmp.eq.s32.totalorder %s14, 0
      %p86 = por %p84, %p85
      %p87 = scmp.ne.s32.totalorder %s76, %s79
      %p88 = scmp.eq.s32.totalorder %s19, 1
      %p89 = por %p87, %p88
      %p90 = scmp.ne.s32.totalorder %s79, %s80
      %p91 = scmp.eq.s32.totalorder %s19, 0
      %p92 = por %p90, %p91
      %p93 = scmp.ne.s32.totalorder %s79, %s80
      %p94 = scmp.eq.s32.totalorder %s20, 1
      %p95 = por %p93, %p94
      %p97 = scmp.ne.s32.totalorder %s80, %s96
      %p98 = scmp.eq.s32.totalorder %s20, 0
      %p99 = por %p97, %p98
      %p100 = scmp.le.s32.totalorder 1, %s14
      %p101 = scmp.lt.s32.totalorder %s14, 3
      %p102 = pnand %p100, %p101
      %p103 = pneg %p102
      // Predicated region
      $region9: #{tpu_custom_call.1} parent=5 // pred_check
        _
      $region10: #{tpu_custom_call.1} parent=5 // pred_check_branch
        %105 = sbr.rel (%p102) target = $region12
      $region11: #{tpu_custom_call.1} parent=5 // pred_region
        %s106 = ssub.s32 %s14, 1
      $region12: #{tpu_custom_call.1} parent=5 // pred_fallthru
        _
      %p107 = scmp.lt.s32.totalorder %s14, 2
      // Predicated region
      $region13: #{tpu_custom_call.1} parent=5 // pred_check
        %p108 = pneg %p107
      $region14: #{tpu_custom_call.1} parent=5 // pred_check_branch
        %110 = sbr.rel (%p108) target = $region16
      $region15: #{tpu_custom_call.1} parent=5 // pred_region
        // Predicated region
        $region17: #{tpu_custom_call.1} parent=15 // pred_check
          %p111 = pneg %p34
        $region18: #{tpu_custom_call.1} parent=15 // pred_check_branch
          %113 = sbr.rel (%p111) target = $region20
        $region19: #{tpu_custom_call.1} parent=15 // pred_region
          %s114 = sand.u32 %s24, 1
          %s115 = scalar_lea.sflag [#allocation3], %s114
          %s116 = sand.u32 %s24, 1
          %s117 = smul.addr %s116, 8
          %s118 = scalar_lea.vmem [#allocation2], %s117
          %s120 = ssub.s32 128, 128
          %121 = vsyncadd %s115, %s120
          %s122 = smul.addr %s14, 128
          %s123 = scalar_lea.hbm %s0, %s122
          %s125 = sshll.u32 %s118, 4
          %s126 = int_to_ptr.vmem [resolvable:$true] %s125
          %128 = dma.hbm_to_vmem [thread:$0]  %s123, 128, %s126, %s115
        $region20: #{tpu_custom_call.1} parent=15 // pred_fallthru
          _
        // Predicated region
        $region21: #{tpu_custom_call.1} parent=15 // pred_check
          %p129 = pneg %p60
        $region22: #{tpu_custom_call.1} parent=15 // pred_check_branch
          %131 = sbr.rel (%p129) target = $region24
        $region23: #{tpu_custom_call.1} parent=15 // pred_region
          %p132 = scmp.lt.s32.totalorder %s14, 7
          %s133 = scalar_select %p132, %s14, 7
          %s134 = smul.addr %s133, 8
          %s135 = scalar_lea.vmem %s1, %s134
        $region24: #{tpu_custom_call.1} parent=15 // pred_fallthru
          _
      $region16: #{tpu_custom_call.1} parent=5 // pred_fallthru
        _
      %p136 = scmp.le.s32.totalorder 1, %s14
      %p137 = scmp.lt.s32.totalorder %s14, 3
      %p138 = pnand %p136, %p137
      %p139 = pneg %p138
      // Predicated region
      $region25: #{tpu_custom_call.1} parent=5 // pred_check
        _
      $region26: #{tpu_custom_call.1} parent=5 // pred_check_branch
        %141 = sbr.rel (%p138) target = $region28
      $region27: #{tpu_custom_call.1} parent=5 // pred_region
        %s142 = ssub.s32 %s14, 1
        %s143 = sand.u32 %s27, 1
        %s144 = scalar_lea.sflag [#allocation3], %s143
        %s145 = sand.u32 %s27, 1
        %s146 = smul.addr %s145, 8
        %s147 = scalar_lea.vmem [#allocation2], %s146
        // Predicated region
        $region29: #{tpu_custom_call.1} parent=27 // pred_check
          %p148 = pneg %p40
        $region30: #{tpu_custom_call.1} parent=27 // pred_check_branch
          %150 = sbr.rel (%p148) target = $region32
        $region31: #{tpu_custom_call.1} parent=27 // pred_region
          %151 = dma.done %s144, 128
        $region32: #{tpu_custom_call.1} parent=27 // pred_fallthru
          _
        %s152 = sand.u32 %s27, 1
        %s153 = scalar_lea.sflag [#allocation3], %s152
        %s154 = sand.u32 %s27, 1
        %s155 = smul.addr %s154, 8
        %s156 = scalar_lea.vmem [#allocation2], %s155
        %p157 = pneg %p40
        %p158 = pneg %p37
        %p159 = scmp.lt.s32.totalorder %s19, 7
        %s160 = scalar_select %p159, %s19, 7
        %s161 = smul.addr %s160, 8
        %s162 = scalar_lea.vmem %s1, %s161
        %p163 = pneg %p66
        %p164 = pneg %p63
        %p165 = pneg %p92
        %p166 = pneg %p89
        %s167 = sand.u32 %s79, 1
        %s168 = scalar_lea.sflag [#allocation4], %s167
        %s169 = sand.u32 %s79, 1
        %s170 = smul.addr %s169, 8
        %s171 = scalar_lea.vmem [#allocation5], %s170
        %p172 = scmp.lt.s32.totalorder %s19, 7
        %s173 = scalar_select %p172, %s19, 7
        %s174 = smul.addr %s173, 8
        %s175 = scalar_lea.vmem %s1, %s174
        %v176 = vld [vmem:[%s175] sm:$0xff]
        %178 = vrot.lane.b32.xlu0 %v176, 32
        %v179 = vpop.permute.xlu0 %178
        %vm181 = vcmask 261120
        %v182 = vsel %vm181, %v176, %v179
        %184 = vrot.lane.b32.xlu0 %v182, 64
        %v185 = vpop.permute.xlu0 %184
        %vm187 = vcmask 523264
        %v188 = vsel %vm187, %v182, %v185
        %v189 = vld [vmem:[%s147] sm:$0xff]
        %v190 = vadd.f32 %v189, %v188
        %191 = vst [vmem:[%s171] sm:$0xff] %v190
        %s192 = sand.u32 %s79, 1
        %s193 = scalar_lea.sflag [#allocation4], %s192
        %s194 = sand.u32 %s79, 1
        %s195 = smul.addr %s194, 8
        %s196 = scalar_lea.vmem [#allocation5], %s195
        // Predicated region
        $region33: #{tpu_custom_call.1} parent=27 // pred_check
          %p197 = pneg %p89
        $region34: #{tpu_custom_call.1} parent=27 // pred_check_branch
          %199 = sbr.rel (%p197) target = $region36
        $region35: #{tpu_custom_call.1} parent=27 // pred_region
          %s201 = ssub.s32 128, 128
          %202 = vsyncadd %s193, %s201
          %s203 = smul.addr %s19, 128
          %s204 = scalar_lea.hbm %s2, %s203
          %s206 = sshll.u32 %s196, 4
          %s207 = int_to_ptr.vmem [resolvable:$true] %s206
          %209 = dma.vmem_to_hbm [thread:$0]  %s207, 128, %s204, %s193
        $region36: #{tpu_custom_call.1} parent=27 // pred_fallthru
          _
      $region28: #{tpu_custom_call.1} parent=5 // pred_fallthru
        _
      %p210 = scmp.le.s32.totalorder 2, %s14
      // Predicated region
      $region37: #{tpu_custom_call.1} parent=5 // pred_check
        %p211 = pneg %p210
      $region38: #{tpu_custom_call.1} parent=5 // pred_check_branch
        %213 = sbr.rel (%p211) target = $region40
      $region39: #{tpu_custom_call.1} parent=5 // pred_region
        %s214 = ssub.s32 %s14, 2
        // Predicated region
        $region41: #{tpu_custom_call.1} parent=39 // pred_check
          %p215 = pneg %p95
        $region42: #{tpu_custom_call.1} parent=39 // pred_check_branch
          %217 = sbr.rel (%p215) target = $region44
        $region43: #{tpu_custom_call.1} parent=39 // pred_region
          %s218 = sand.u32 %s80, 1
          %s219 = scalar_lea.sflag [#allocation4], %s218
          %s220 = sand.u32 %s80, 1
          %s221 = smul.addr %s220, 8
          %s222 = scalar_lea.vmem [#allocation5], %s221
          %223 = dma.done %s219, 128
        $region44: #{tpu_custom_call.1} parent=39 // pred_fallthru
          _
      $region40: #{tpu_custom_call.1} parent=5 // pred_fallthru
        _
    $region6: #{tpu_custom_call.1} parent=1 // loop_footer
      %s18 = sadd.s32 1, %s14
    $region7: #{tpu_custom_call.1} parent=1 // loop_footer_branch
      %13 = sbr.rel target = $region3
    $region8: #{tpu_custom_call.1} parent=1 // loop_exit
      _
    %224 = vsyncpa [#allocation3], 1
    %s225 = scalar_lea.sflag [#allocation3], 1
    %226 = vsyncpa %s225, 1
    %227 = vsyncpa [#allocation4], 1
    %s228 = scalar_lea.sflag [#allocation4], 1
    %229 = vsyncpa %s228, 1

</llo_original>
